<compile_context>
chip_gen: v5e
topology: v5e:2x2
jax: 0.10.0
libtpu: 0.0.40
codegen_flags: <defaults>
</compile_context>

<pallas_src>
import functools
import math

import jax
import jax.numpy as jnp
from jax.experimental import pallas as pl
from jax.experimental.pallas import tpu as pltpu


# ----------------------------- small helpers --------------------------------
def _round_up(x, m):
    return (x + m - 1) // m * m


def _round_down(x, m):
    return (x // m) * m


def _lane_pad(c):
    # VMEM footprint of the last (lane) dim: padded to a multiple of 128 lanes.
    return _round_up(max(c, 1), 128)


def _sub_pad(r):
    # Sublane padding (conservative: 8 also for sub-32-bit dtypes).
    return _round_up(max(r, 1), 8)


def _vmem_budgets():
    """(streamed_budget, resident_cap, vmem_capacity) in bytes, per generation."""
    cap = None
    try:
        info = pltpu.get_tpu_info()
        cap = getattr(info, "vmem_capacity_bytes", None)
    except Exception:
        cap = None
    if not cap:
        cap = 64 * 2**20              # conservative default: v7x per-TC VMEM
    cap = max(int(cap), 64 * 2**20)
    if cap >= 96 * 2**20:             # v5e / v6e: 128 MiB physical VMEM
        streamed = 16 * 2**20
        resident_cap = 12 * 2**20
    else:                             # v7x: 64 MiB per TensorCore
        streamed = 12 * 2**20
        resident_cap = 8 * 2**20
    return streamed, resident_cap, cap


def _pick_mid_slab(kmid):
    """Hidden-dim slab width (keeps the f32 hidden temp small on v7x)."""
    if kmid <= 512:
        return kmid
    for s in (512, 256, 128):
        if kmid % s == 0:
            return s
    return kmid


def _resident_spec(shape):
    """Constant-index (resident) operand; single-buffer it to halve held VMEM."""
    try:
        return pl.BlockSpec(shape, lambda i: (0, 0), pipeline_mode=pl.Buffered(1))
    except Exception:
        # Fallback if this jax build does not accept pipeline_mode here.
        return pl.BlockSpec(shape, lambda i: (0, 0))


# -------------------------------- kernel ------------------------------------
def _mlp_kernel(x_ref, w1_ref, b1_ref, w2_ref, b2_ref, o_ref, *, mid_slab):
    # x_ref : (tm, K)     streamed row tile (K = Cin, or g*Cin when group-folded)
    # w1_ref: (K, Mid)    resident first Linear weight (transposed / block-diag)
    # b1_ref: (1, Mid)    f32
    # w2_ref: (Mid, N)    resident second Linear weight
    # b2_ref: (1, N)      f32
    # o_ref : (tm, N)
    x = x_ref[...]
    kmid = w1_ref.shape[1]
    n_slabs = kmid // mid_slab
    acc = None
    for s in range(n_slabs):
        lo = s * mid_slab
        hi = lo + mid_slab
        h = jnp.dot(x, w1_ref[:, lo:hi], preferred_element_type=jnp.float32)
        h = jnp.maximum(h + b1_ref[:, lo:hi], 0.0)            # bias + ReLU in f32
        y = jnp.dot(h.astype(w2_ref.dtype), w2_ref[lo:hi, :],
                    preferred_element_type=jnp.float32)
        acc = y if acc is None else acc + y
    o_ref[...] = (acc + b2_ref[...]).astype(o_ref.dtype)


# ------------------------------ jitted forward -------------------------------
def _mlp_forward_impl(x, w1k, b1k, w2k, b2k, *, g, cin, cout, fold,
                      io_dtype, block_rows):
    lead = x.shape[:-1]
    out_dtype = x.dtype
    x2d = x.reshape(-1, cin)
    m = x2d.shape[0]

    if fold:
        m_pad = _round_up(max(m, 1), g)
        if m_pad != m:
            # Zero rows stay finite through bias+ReLU; they are sliced off below.
            x2d = jnp.pad(x2d, ((0, m_pad - m), (0, 0)))
        xk = x2d.reshape(m_pad // g, g * cin)                 # contiguous -> free
    else:
        m_pad = m
        xk = x2d
    xk = xk.astype(io_dtype)

    mk, kin = xk.shape
    kmid = w1k.shape[1]
    kout = w2k.shape[1]
    assert kin == w1k.shape[0]

    # ---- row-tile sizing (generation-aware VMEM accounting) ------------------
    streamed_budget, _, vmem_cap = _vmem_budgets()
    io_bytes = jnp.dtype(io_dtype).itemsize
    mid_slab = _pick_mid_slab(kmid)

    # bytes that scale with tm: double-buffered x/out tiles + f32 hidden slab + acc
    per_row_bytes = (2 * (_lane_pad(kin) + _lane_pad(kout)) * io_bytes
                     + (_lane_pad(mid_slab) + _lane_pad(kout)) * 4)

    tm = _round_up(max(block_rows, 8), 8)
    while tm > 8 and tm * per_row_bytes > streamed_budget:
        tm //= 2
    tm = max(8, _round_up(tm, 8))

    if mk <= 8:
        tm = mk                                               # single full block
    else:
        tm = min(tm, _round_down(mk, 8))
        if mk >= 4 * 64:
            # >= 4 grid steps so both v7x TensorCores get >= 2 steps each
            # (steady-state double buffering per core); steps stay >= 64 rows.
            tm = min(tm, max(64, _round_up(pl.cdiv(mk, 4), 8)))
        tm = max(8, tm)

    grid = (pl.cdiv(mk, tm),)                                 # ragged last block masked

    # ---- explicit scoped-VMEM limit (streamed + residents + temps + margin) ---
    resident_bytes = (
        (_sub_pad(kin) * _lane_pad(kmid) + _sub_pad(kmid) * _lane_pad(kout)) * io_bytes
        + _sub_pad(1) * (_lane_pad(kmid) + _lane_pad(kout)) * 4)
    total_bytes = tm * per_row_bytes + resident_bytes
    vmem_limit = int(min(max(total_bytes + (6 << 20), 32 << 20),
                         vmem_cap - (8 << 20)))

    out = pl.pallas_call(
        functools.partial(_mlp_kernel, mid_slab=mid_slab),
        out_shape=jax.ShapeDtypeStruct((mk, kout), out_dtype),
        grid_spec=pltpu.PrefetchScalarGridSpec(
            num_scalar_prefetch=0,
            grid=grid,
            in_specs=[
                pl.BlockSpec((tm, kin), lambda i: (i, 0)),    # streamed x tiles
                _resident_spec((kin, kmid)),                  # W1 (resident)
                _resident_spec((1, kmid)),                    # b1
                _resident_spec((kmid, kout)),                 # W2 (resident)
                _resident_spec((1, kout)),                    # b2
            ],
            out_specs=pl.BlockSpec((tm, kout), lambda i: (i, 0)),
        ),
        compiler_params=pltpu.CompilerParams(
            dimension_semantics=("parallel",),
            vmem_limit_bytes=vmem_limit,
        ),
    )(xk, w1k, b1k, w2k, b2k)

    if fold:
        out = out.reshape(m_pad, cout)[:m]
    return out.reshape(*lead, cout).astype(out_dtype)


# ----------------------- one-time parameter preparation ----------------------
def make_mlp(w1_t, b1, w2_t, b2, *, io_dtype=jnp.float32, block_rows=1024):
    """Return a jitted forward(x) for y = relu(x @ w1_t + b1) @ w2_t + b2.

    w1_t: (Cin, Cmid), w2_t: (Cmid, Cout) are the PyTorch weights transposed;
    b1: (Cmid,), b2: (Cout,).  The lane-dense block-diagonal weight expansion
    runs exactly once here (not per call).
    """
    w1_t = jnp.asarray(w1_t)
    b1 = jnp.asarray(b1)
    w2_t = jnp.asarray(w2_t)
    b2 = jnp.asarray(b2)

    cin, cmid = w1_t.shape
    cmid2, cout = w2_t.shape
    assert cmid2 == cmid

    # Minimal g with (g*Cin) % 128 == 0 (do NOT grow further: extra K/N is zero blocks).
    g = 128 // math.gcd(cin, 128)
    w_bytes = jnp.dtype(io_dtype).itemsize
    dense_w_bytes = ((g * cin) * (g * cmid) + (g * cmid) * (g * cout)) * w_bytes
    _, resident_cap, _ = _vmem_budgets()
    fold = (g > 1) and (dense_w_bytes <= resident_cap)

    if fold:
        eye1 = jnp.eye(g, dtype=w1_t.dtype)
        eye2 = jnp.eye(g, dtype=w2_t.dtype)
        w1k = jnp.kron(eye1, w1_t).astype(io_dtype)           # (g*Cin, g*Cmid)
        w2k = jnp.kron(eye2, w2_t).astype(io_dtype)           # (g*Cmid, g*Cout)
        b1k = jnp.tile(b1, g).reshape(1, g * cmid).astype(jnp.float32)
        b2k = jnp.tile(b2, g).reshape(1, g * cout).astype(jnp.float32)
    else:
        w1k = w1_t.astype(io_dtype)
        w2k = w2_t.astype(io_dtype)
        b1k = b1.reshape(1, cmid).astype(jnp.float32)
        b2k = b2.reshape(1, cout).astype(jnp.float32)

    # Make the one-time expansion concrete so it never re-runs inside the forward.
    for a in (w1k, b1k, w2k, b2k):
        jax.block_until_ready(a)

    fwd = jax.jit(functools.partial(
        _mlp_forward_impl, g=g, cin=cin, cout=cout, fold=fold,
        io_dtype=io_dtype, block_rows=block_rows))

    def forward(x):
        return fwd(x, w1k, b1k, w2k, b2k)

    return forward


def init_mlp_params(key, in_channels, mid_channels, out_channels, dtype=jnp.float32):
    """Deterministic init matching nn.Linear's U(-1/sqrt(fan_in), 1/sqrt(fan_in))."""
    k1, k2, k3, k4 = jax.random.split(key, 4)
    bound1 = 1.0 / jnp.sqrt(in_channels)
    bound2 = 1.0 / jnp.sqrt(mid_channels)
    # Stored transposed relative to PyTorch's (out, in): here (in, out).
    w1_t = jax.random.uniform(k1, (in_channels, mid_channels), dtype, -bound1, bound1)
    b1 = jax.random.uniform(k2, (mid_channels,), dtype, -bound1, bound1)
    w2_t = jax.random.uniform(k3, (mid_channels, out_channels), dtype, -bound2, bound2)
    b2 = jax.random.uniform(k4, (out_channels,), dtype, -bound2, bound2)
    return w1_t, b1, w2_t, b2


if __name__ == "__main__":
    key = jax.random.PRNGKey(0)
    kx, kp, kx2 = jax.random.split(key, 3)

    in_channels, mid_channels, out_channels = 4, 32, 4
    w1_t, b1, w2_t, b2 = init_mlp_params(kp, in_channels, mid_channels, out_channels)

    mlp = make_mlp(w1_t, b1, w2_t, b2)                        # f32, exact semantics

    # Case 1: lane-dense folded path (rows divisible by g = 32 for Cin = 4).
    x = jax.random.normal(kx, (2, 256, in_channels), dtype=jnp.float32)
    y = mlp(x)
    jax.block_until_ready(y)
    ref = jnp.maximum(x @ w1_t + b1, 0.0) @ w2_t + b2
    assert y.shape == (2, 256, out_channels)
    assert jnp.allclose(y, ref, atol=1e-5, rtol=1e-5)

    # Case 2: row count not a multiple of g (m = 150): zero-pad rows, stay lane-dense.
    x2 = jax.random.normal(kx2, (3, 50, in_channels), dtype=jnp.float32)
    y2 = mlp(x2)
    jax.block_until_ready(y2)
    ref2 = jnp.maximum(x2 @ w1_t + b1, 0.0) @ w2_t + b2
    assert y2.shape == (3, 50, out_channels)
    assert jnp.allclose(y2, ref2, atol=1e-5, rtol=1e-5)

    # Case 3: optional bf16 HBM I/O (halves memory traffic on v6e/v7x).
    mlp_bf16 = make_mlp(w1_t, b1, w2_t, b2, io_dtype=jnp.bfloat16)
    y3 = mlp_bf16(x)
    jax.block_until_ready(y3)
    assert y3.shape == (2, 256, out_channels)
    assert bool(jnp.max(jnp.abs(y3 - ref)) < 0.25)

    print("KERNEL_OK")
</pallas_src>

<mosaic_0001>
module attributes {stable_mosaic.version = 11 : i64} {
  func.func @_mlp_kernel(%arg0: i32, %arg1: memref<16x128xf32, #tpu.memory_space<vmem>>, %arg2: memref<128x1024xf32, #tpu.memory_space<vmem>>, %arg3: memref<1x1024xf32, #tpu.memory_space<vmem>>, %arg4: memref<1024x128xf32, #tpu.memory_space<vmem>>, %arg5: memref<1x128xf32, #tpu.memory_space<vmem>>, %arg6: memref<16x128xf32, #tpu.memory_space<vmem>>) attributes {dimension_semantics = [#tpu.dimension_semantics<parallel>], iteration_bounds = array<i64: 1>, scalar_prefetch = 0 : i64, scratch_operands = 0 : i64, tpu.core_type = #tpu.core_type<tc>, window_params = [{transform_indices = @transform_0, window_bounds = array<i64: 16, 128>}, {pipeline_mode = #tpu.pipeline_mode<synchronous>, transform_indices = @transform_1, window_bounds = array<i64: 128, 1024>}, {pipeline_mode = #tpu.pipeline_mode<synchronous>, transform_indices = @transform_2, window_bounds = array<i64: 1, 1024>}, {pipeline_mode = #tpu.pipeline_mode<synchronous>, transform_indices = @transform_3, window_bounds = array<i64: 1024, 128>}, {pipeline_mode = #tpu.pipeline_mode<synchronous>, transform_indices = @transform_4, window_bounds = array<i64: 1, 128>}, {transform_indices = @transform_5, window_bounds = array<i64: 16, 128>}]} {
    %c0 = arith.constant 0 : index
    %c0_0 = arith.constant 0 : index
    %0 = vector.load %arg1[%c0, %c0_0] : memref<16x128xf32, #tpu.memory_space<vmem>>, vector<16x128xf32>
    %c0_1 = arith.constant 0 : index
    %c0_2 = arith.constant 0 : index
    %1 = vector.load %arg2[%c0_1, %c0_2] : memref<128x1024xf32, #tpu.memory_space<vmem>>, vector<128x512xf32>
    %cst = arith.constant dense<0.000000e+00> : vector<16x512xf32>
    %2 = tpu.matmul %0, %1, %cst {dimension_numbers = #tpu.dot_dimension_numbers<[1], [0], [0], [1], [0, 0, 1, 1], [], []>} : vector<16x128xf32>, vector<128x512xf32>, vector<16x512xf32> -> vector<16x512xf32>
    %c0_3 = arith.constant 0 : index
    %c0_4 = arith.constant 0 : index
    %3 = vector.load %arg3[%c0_3, %c0_4] : memref<1x1024xf32, #tpu.memory_space<vmem>>, vector<1x512xf32>
    %4 = vector.broadcast %3 : vector<1x512xf32> to vector<16x512xf32>
    %5 = arith.addf %2, %4 : vector<16x512xf32>
    %cst_5 = arith.constant 0.000000e+00 : f32
    %6 = vector.broadcast %cst_5 : f32 to vector<16x512xf32>
    %7 = arith.maximumf %5, %6 : vector<16x512xf32>
    %c0_6 = arith.constant 0 : index
    %c0_7 = arith.constant 0 : index
    %8 = vector.load %arg4[%c0_6, %c0_7] : memref<1024x128xf32, #tpu.memory_space<vmem>>, vector<512x128xf32>
    %cst_8 = arith.constant dense<0.000000e+00> : vector<16x128xf32>
    %9 = tpu.matmul %7, %8, %cst_8 {dimension_numbers = #tpu.dot_dimension_numbers<[1], [0], [0], [1], [0, 0, 1, 1], [], []>} : vector<16x512xf32>, vector<512x128xf32>, vector<16x128xf32> -> vector<16x128xf32>
    %c0_9 = arith.constant 0 : index
    %c512 = arith.constant 512 : index
    %10 = vector.load %arg2[%c0_9, %c512] : memref<128x1024xf32, #tpu.memory_space<vmem>>, vector<128x512xf32>
    %cst_10 = arith.constant dense<0.000000e+00> : vector<16x512xf32>
    %11 = tpu.matmul %0, %10, %cst_10 {dimension_numbers = #tpu.dot_dimension_numbers<[1], [0], [0], [1], [0, 0, 1, 1], [], []>} : vector<16x128xf32>, vector<128x512xf32>, vector<16x512xf32> -> vector<16x512xf32>
    %c0_11 = arith.constant 0 : index
    %c512_12 = arith.constant 512 : index
    %12 = vector.load %arg3[%c0_11, %c512_12] : memref<1x1024xf32, #tpu.memory_space<vmem>>, vector<1x512xf32>
    %13 = vector.broadcast %12 : vector<1x512xf32> to vector<16x512xf32>
    %14 = arith.addf %11, %13 : vector<16x512xf32>
    %cst_13 = arith.constant 0.000000e+00 : f32
    %15 = vector.broadcast %cst_13 : f32 to vector<16x512xf32>
    %16 = arith.maximumf %14, %15 : vector<16x512xf32>
    %c512_14 = arith.constant 512 : index
    %c0_15 = arith.constant 0 : index
    %17 = vector.load %arg4[%c512_14, %c0_15] : memref<1024x128xf32, #tpu.memory_space<vmem>>, vector<512x128xf32>
    %cst_16 = arith.constant dense<0.000000e+00> : vector<16x128xf32>
    %18 = tpu.matmul %16, %17, %cst_16 {dimension_numbers = #tpu.dot_dimension_numbers<[1], [0], [0], [1], [0, 0, 1, 1], [], []>} : vector<16x512xf32>, vector<512x128xf32>, vector<16x128xf32> -> vector<16x128xf32>
    %19 = arith.addf %9, %18 : vector<16x128xf32>
    %c0_17 = arith.constant 0 : index
    %c0_18 = arith.constant 0 : index
    %20 = vector.load %arg5[%c0_17, %c0_18] : memref<1x128xf32, #tpu.memory_space<vmem>>, vector<1x128xf32>
    %21 = vector.broadcast %20 : vector<1x128xf32> to vector<16x128xf32>
    %22 = arith.addf %19, %21 : vector<16x128xf32>
    %c0_19 = arith.constant 0 : index
    %c0_20 = arith.constant 0 : index
    %23 = vector.load %arg6[%c0_19, %c0_20] : memref<16x128xf32, #tpu.memory_space<vmem>>, vector<16x128xf32>
    tpu.vector_store %arg6[%c0_19, %c0_20], %22 {strides = array<i32>} : memref<16x128xf32, #tpu.memory_space<vmem>>, vector<16x128xf32>,
    return
  }
  func.func @transform_0(%arg0: i32) -> (i32, i32) {
    %c0_i32 = arith.constant 0 : i32
    %c0_i32_0 = arith.constant 0 : i32
    return %arg0, %c0_i32 : i32, i32
  }
  func.func @transform_1(%arg0: i32) -> (i32, i32) {
    %c0_i32 = arith.constant 0 : i32
    %c0_i32_0 = arith.constant 0 : i32
    %c0_i32_1 = arith.constant 0 : i32
    return %c0_i32, %c0_i32_0 : i32, i32
  }
  func.func @transform_2(%arg0: i32) -> (i32, i32) {
    %c0_i32 = arith.constant 0 : i32
    %c0_i32_0 = arith.constant 0 : i32
    %c0_i32_1 = arith.constant 0 : i32
    return %c0_i32, %c0_i32_0 : i32, i32
  }
  func.func @transform_3(%arg0: i32) -> (i32, i32) {
    %c0_i32 = arith.constant 0 : i32
    %c0_i32_0 = arith.constant 0 : i32
    %c0_i32_1 = arith.constant 0 : i32
    return %c0_i32, %c0_i32_0 : i32, i32
  }
  func.func @transform_4(%arg0: i32) -> (i32, i32) {
    %c0_i32 = arith.constant 0 : i32
    %c0_i32_0 = arith.constant 0 : i32
    %c0_i32_1 = arith.constant 0 : i32
    return %c0_i32, %c0_i32_0 : i32, i32
  }
  func.func @transform_5(%arg0: i32) -> (i32, i32) {
    %c0_i32 = arith.constant 0 : i32
    %c0_i32_0 = arith.constant 0 : i32
    return %arg0, %c0_i32 : i32, i32
  }
}

</mosaic_0001>

<llo_original>
// kernel: _mlp_forward_impl.1
$region0: #{_mlp_forward_impl.1}
  #allocation0 [shape = 'u32[]', space=smem, size = 0x4, offset = 0x4, fixed_abs, tag = 'smem constant byte address 0x4 - core index']
  #allocation1 [shape = 'u32[72,128]{1,0:T(1,128)}', space=vmem, size = 0x9000, scoped, tag = 'internal scratch']
  %s0 = inlined_call_operand.vmem [shape: f32[16,128], index: 0, kind: input, shape index: {}]
  %s1 = inlined_call_operand.vmem [shape: f32[128,1024], index: 1, kind: input, shape index: {}]
  %s2 = inlined_call_operand.vmem [shape: f32[1,1024], index: 2, kind: input, shape index: {}]
  %s3 = inlined_call_operand.hbm [shape: f32[1024,128], index: 3, kind: input, shape index: {}]
  %s4 = inlined_call_operand.vmem [shape: f32[1,128], index: 4, kind: input, shape index: {}]
  %s5 = inlined_call_operand.vmem [shape: f32[16,128], index: 5, kind: output, shape index: {}]
  %s6 = sld [smem:[#allocation0]]
  $region34: #{_mlp_forward_impl.1} parent=0
    _
  %s8 = ssub.s32 1, %s6
  %s9 = scalar_select 0, %s8, %s6
  $region1: #{_mlp_forward_impl.1} parent=0
    #allocation2 [shape = 'u8[524288]{0}', space=vmem, size = 0x80000, scoped, tag = 'input window, operand 3, single buffered']
    #allocation3 [shape = 's32[1]{0}', space=sflag, size = 0x4, scoped, tag = 'scoped memory for _mlp_forward_impl.1']
    %10 = vsyncpa [#allocation3], 0
    // Predicated region
    $region2: #{_mlp_forward_impl.1} parent=1 // pred_check
      _
    $region3: #{_mlp_forward_impl.1} parent=1 // pred_check_branch
      %12 = sbr.rel (0) target = $region5
    $region4: #{_mlp_forward_impl.1} parent=1 // pred_region
      _
    $region5: #{_mlp_forward_impl.1} parent=1 // pred_fallthru
      _
    // Predicated region
    $region6: #{_mlp_forward_impl.1} parent=1 // pred_check
      _
    $region7: #{_mlp_forward_impl.1} parent=1 // pred_check_branch
      %14 = sbr.rel (0) target = $region9
    $region8: #{_mlp_forward_impl.1} parent=1 // pred_region
      _
    $region9: #{_mlp_forward_impl.1} parent=1 // pred_fallthru
      _
    // Predicated region
    $region10: #{_mlp_forward_impl.1} parent=1 // pred_check
      _
    $region11: #{_mlp_forward_impl.1} parent=1 // pred_check_branch
      %16 = sbr.rel (0) target = $region13
    $region12: #{_mlp_forward_impl.1} parent=1 // pred_region
      _
    $region13: #{_mlp_forward_impl.1} parent=1 // pred_fallthru
      _
    // Predicated region
    $region14: #{_mlp_forward_impl.1} parent=1 // pred_check
      _
    $region15: #{_mlp_forward_impl.1} parent=1 // pred_check_branch
      %18 = sbr.rel (0) target = $region17
    $region16: #{_mlp_forward_impl.1} parent=1 // pred_region
      %20 = vsyncadd [#allocation3], 0
      %s21 = sshll.u32 %s3, 4
      %s22 = int_to_ptr.hbm [resolvable:$true] %s21
      %s23 = sshll.u32 [#allocation2], 4
      %s24 = int_to_ptr.vmem [resolvable:$true] %s23
      %29 = dma.hbm_to_vmem [thread:$0]  %s22, 16384, %s24, [#allocation3], 128, 128, 8
    $region17: #{_mlp_forward_impl.1} parent=1 // pred_fallthru
      _
    // Predicated region
    $region18: #{_mlp_forward_impl.1} parent=1 // pred_check
      _
    $region19: #{_mlp_forward_impl.1} parent=1 // pred_check_branch
      %31 = sbr.rel (0) target = $region21
    $region20: #{_mlp_forward_impl.1} parent=1 // pred_region
      _
    $region21: #{_mlp_forward_impl.1} parent=1 // pred_fallthru
      _
    // Predicated region
    $region22: #{_mlp_forward_impl.1} parent=1 // pred_check
      _
    $region23: #{_mlp_forward_impl.1} parent=1 // pred_check_branch
      %33 = sbr.rel (0) target = $region25
    $region24: #{_mlp_forward_impl.1} parent=1 // pred_region
      %35 = dma.done [#allocation3], 16384
    $region25: #{_mlp_forward_impl.1} parent=1 // pred_fallthru
      _
    %v36 = vld [vmem:[%s0] sm:$0xff]
    %v37 = vld [vmem:[%s0 + $0x8] sm:$0xff]
    %v38 = vld [vmem:[%s1] sm:$0xff]
    %v39 = vld [vmem:[%s1 + $0x8] sm:$0xff]
    %v40 = vld [vmem:[%s1 + $0x10] sm:$0xff]
    %v41 = vld [vmem:[%s1 + $0x18] sm:$0xff]
    %v42 = vld [vmem:[%s1 + $0x40] sm:$0xff]
    %v43 = vld [vmem:[%s1 + $0x48] sm:$0xff]
    %v44 = vld [vmem:[%s1 + $0x50] sm:$0xff]
    %v45 = vld [vmem:[%s1 + $0x58] sm:$0xff]
    %v46 = vld [vmem:[%s1 + $0x80] sm:$0xff]
    %v47 = vld [vmem:[%s1 + $0x88] sm:$0xff]
    %v48 = vld [vmem:[%s1 + $0x90] sm:$0xff]
    %v49 = vld [vmem:[%s1 + $0x98] sm:$0xff]
    %v50 = vld [vmem:[%s1 + $0xc0] sm:$0xff]
    %v51 = vld [vmem:[%s1 + $0xc8] sm:$0xff]
    %v52 = vld [vmem:[%s1 + $0xd0] sm:$0xff]
    %v53 = vld [vmem:[%s1 + $0xd8] sm:$0xff]
    %v54 = vld [vmem:[%s1 + $0x100] sm:$0xff]
    %v55 = vld [vmem:[%s1 + $0x108] sm:$0xff]
    %v56 = vld [vmem:[%s1 + $0x110] sm:$0xff]
    %v57 = vld [vmem:[%s1 + $0x118] sm:$0xff]
    %v58 = vld [vmem:[%s1 + $0x140] sm:$0xff]
    %v59 = vld [vmem:[%s1 + $0x148] sm:$0xff]
    %v60 = vld [vmem:[%s1 + $0x150] sm:$0xff]
    %v61 = vld [vmem:[%s1 + $0x158] sm:$0xff]
    %v62 = vld [vmem:[%s1 + $0x180] sm:$0xff]
    %v63 = vld [vmem:[%s1 + $0x188] sm:$0xff]
    %v64 = vld [vmem:[%s1 + $0x190] sm:$0xff]
    %v65 = vld [vmem:[%s1 + $0x198] sm:$0xff]
    %v66 = vld [vmem:[%s1 + $0x1c0] sm:$0xff]
    %v67 = vld [vmem:[%s1 + $0x1c8] sm:$0xff]
    %v68 = vld [vmem:[%s1 + $0x1d0] sm:$0xff]
    %v69 = vld [vmem:[%s1 + $0x1d8] sm:$0xff]
    %v70 = vld [vmem:[%s1 + $0x200] sm:$0xff]
    %v71 = vld [vmem:[%s1 + $0x208] sm:$0xff]
    %v72 = vld [vmem:[%s1 + $0x210] sm:$0xff]
    %v73 = vld [vmem:[%s1 + $0x218] sm:$0xff]
    %v74 = vld [vmem:[%s1 + $0x240] sm:$0xff]
    %v75 = vld [vmem:[%s1 + $0x248] sm:$0xff]
    %v76 = vld [vmem:[%s1 + $0x250] sm:$0xff]
    %v77 = vld [vmem:[%s1 + $0x258] sm:$0xff]
    %v78 = vld [vmem:[%s1 + $0x280] sm:$0xff]
    %v79 = vld [vmem:[%s1 + $0x288] sm:$0xff]
    %v80 = vld [vmem:[%s1 + $0x290] sm:$0xff]
    %v81 = vld [vmem:[%s1 + $0x298] sm:$0xff]
    %v82 = vld [vmem:[%s1 + $0x2c0] sm:$0xff]
    %v83 = vld [vmem:[%s1 + $0x2c8] sm:$0xff]
    %v84 = vld [vmem:[%s1 + $0x2d0] sm:$0xff]
    %v85 = vld [vmem:[%s1 + $0x2d8] sm:$0xff]
    %v86 = vld [vmem:[%s1 + $0x300] sm:$0xff]
    %v87 = vld [vmem:[%s1 + $0x308] sm:$0xff]
    %v88 = vld [vmem:[%s1 + $0x310] sm:$0xff]
    %v89 = vld [vmem:[%s1 + $0x318] sm:$0xff]
    %v90 = vld [vmem:[%s1 + $0x340] sm:$0xff]
    %v91 = vld [vmem:[%s1 + $0x348] sm:$0xff]
    %v92 = vld [vmem:[%s1 + $0x350] sm:$0xff]
    %v93 = vld [vmem:[%s1 + $0x358] sm:$0xff]
    %v94 = vld [vmem:[%s1 + $0x380] sm:$0xff]
    %v95 = vld [vmem:[%s1 + $0x388] sm:$0xff]
    %v96 = vld [vmem:[%s1 + $0x390] sm:$0xff]
    %v97 = vld [vmem:[%s1 + $0x398] sm:$0xff]
    %v98 = vld [vmem:[%s1 + $0x3c0] sm:$0xff]
    %v99 = vld [vmem:[%s1 + $0x3c8] sm:$0xff]
    %v100 = vld [vmem:[%s1 + $0x3d0] sm:$0xff]
    %v101 = vld [vmem:[%s1 + $0x3d8] sm:$0xff]
    %v102 = vld [vmem:[%s2] sm:$0xf]
    %v104 = vperm.slane %v102, 0
    %v105 = vperm.slane %v102, 1
    %v106 = vperm.slane %v102, 2
    %v107 = vperm.slane %v102, 3
    %112 = vmatpush.msra.mxu0 %v98
    %113 = vmatpush.msra.mxu0 %v94
    %114 = vmatpush.msra.mxu0 %v90
    %115 = vmatpush.msra.mxu0 %v86
    %116 = vmatpush.msra.mxu0 %v82
    %117 = vmatpush.msra.mxu0 %v78
    %118 = vmatpush.msra.mxu0 %v74
    %119 = vmatpush.msra.mxu0 %v70
    %120 = vmatpush.msra.mxu0 %v66
    %121 = vmatpush.msra.mxu0 %v62
    %122 = vmatpush.msra.mxu0 %v58
    %123 = vmatpush.msra.mxu0 %v54
    %124 = vmatpush.msra.mxu0 %v50
    %125 = vmatpush.msra.mxu0 %v46
    %126 = vmatpush.msra.mxu0 %v42
    %127 = vmatpush.msra.mxu0 %v38
    %128 = vmatmul.f32.gmra.mxu0 %v36
    %v129 = vpop.f32.mrf.mxu0
    %v130 = vadd.f32 %v104, %v129
    %131 = vmatmul.f32.gmra.mxu0 %v37
    %v132 = vpop.f32.mrf.mxu0
    %v133 = vadd.f32 %v104, %v132
    %134 = vdwg.mxu0
    %135 = vmatpush.msra.mxu0 %v99
    %136 = vmatpush.msra.mxu0 %v95
    %137 = vmatpush.msra.mxu0 %v91
    %138 = vmatpush.msra.mxu0 %v87
    %139 = vmatpush.msra.mxu0 %v83
    %140 = vmatpush.msra.mxu0 %v79
    %141 = vmatpush.msra.mxu0 %v75
    %142 = vmatpush.msra.mxu0 %v71
    %143 = vmatpush.msra.mxu0 %v67
    %144 = vmatpush.msra.mxu0 %v63
    %145 = vmatpush.msra.mxu0 %v59
    %146 = vmatpush.msra.mxu0 %v55
    %147 = vmatpush.msra.mxu0 %v51
    %148 = vmatpush.msra.mxu0 %v47
    %149 = vmatpush.msra.mxu0 %v43
    %150 = vmatpush.msra.mxu0 %v39
    %151 = vmatmul.f32.gmra.mxu0 %v36
    %v152 = vpop.f32.mrf.mxu0
    %v153 = vadd.f32 %v105, %v152
    %154 = vmatmul.f32.gmra.mxu0 %v37
    %v155 = vpop.f32.mrf.mxu0
    %v156 = vadd.f32 %v105, %v155
    %157 = vdwg.mxu0
    %158 = vmatpush.msra.mxu0 %v100
    %159 = vmatpush.msra.mxu0 %v96
    %160 = vmatpush.msra.mxu0 %v92
    %161 = vmatpush.msra.mxu0 %v88
    %162 = vmatpush.msra.mxu0 %v84
    %163 = vmatpush.msra.mxu0 %v80
    %164 = vmatpush.msra.mxu0 %v76
    %165 = vmatpush.msra.mxu0 %v72
    %166 = vmatpush.msra.mxu0 %v68
    %167 = vmatpush.msra.mxu0 %v64
    %168 = vmatpush.msra.mxu0 %v60
    %169 = vmatpush.msra.mxu0 %v56
    %170 = vmatpush.msra.mxu0 %v52
    %171 = vmatpush.msra.mxu0 %v48
    %172 = vmatpush.msra.mxu0 %v44
    %173 = vmatpush.msra.mxu0 %v40
    %174 = vmatmul.f32.gmra.mxu0 %v36
    %v175 = vpop.f32.mrf.mxu0
    %v176 = vadd.f32 %v106, %v175
    %177 = vmatmul.f32.gmra.mxu0 %v37
    %v178 = vpop.f32.mrf.mxu0
    %v179 = vadd.f32 %v106, %v178
    %180 = vdwg.mxu0
    %181 = vmatpush.msra.mxu0 %v101
    %182 = vmatpush.msra.mxu0 %v97
    %183 = vmatpush.msra.mxu0 %v93
    %184 = vmatpush.msra.mxu0 %v89
    %185 = vmatpush.msra.mxu0 %v85
    %186 = vmatpush.msra.mxu0 %v81
    %187 = vmatpush.msra.mxu0 %v77
    %188 = vmatpush.msra.mxu0 %v73
    %189 = vmatpush.msra.mxu0 %v69
    %190 = vmatpush.msra.mxu0 %v65
    %191 = vmatpush.msra.mxu0 %v61
    %192 = vmatpush.msra.mxu0 %v57
    %193 = vmatpush.msra.mxu0 %v53
    %194 = vmatpush.msra.mxu0 %v49
    %195 = vmatpush.msra.mxu0 %v45
    %196 = vmatpush.msra.mxu0 %v41
    %197 = vmatmul.f32.gmra.mxu0 %v36
    %v198 = vpop.f32.mrf.mxu0
    %v199 = vadd.f32 %v107, %v198
    %200 = vmatmul.f32.gmra.mxu0 %v37
    %v201 = vpop.f32.mrf.mxu0
    %v202 = vadd.f32 %v107, %v201
    %203 = vdwg.mxu0
    %v204 = vmax.f32 %v130, 0.0
    %v205 = vmax.f32 %v153, 0.0
    %v206 = vmax.f32 %v176, 0.0
    %v207 = vmax.f32 %v199, 0.0
    %v208 = vmax.f32 %v133, 0.0
    %v209 = vmax.f32 %v156, 0.0
    %v210 = vmax.f32 %v179, 0.0
    %v211 = vmax.f32 %v202, 0.0
    %v212 = vld [vmem:[#allocation2] sm:$0xff]
    %v213 = vld [vmem:[#allocation2 + $0x8] sm:$0xff]
    %v214 = vld [vmem:[#allocation2 + $0x10] sm:$0xff]
    %v215 = vld [vmem:[#allocation2 + $0x18] sm:$0xff]
    %v216 = vld [vmem:[#allocation2 + $0x20] sm:$0xff]
    %v217 = vld [vmem:[#allocation2 + $0x28] sm:$0xff]
    %v218 = vld [vmem:[#allocation2 + $0x30] sm:$0xff]
    %v219 = vld [vmem:[#allocation2 + $0x38] sm:$0xff]
    %v220 = vld [vmem:[#allocation2 + $0x40] sm:$0xff]
    %v221 = vld [vmem:[#allocation2 + $0x48] sm:$0xff]
    %v222 = vld [vmem:[#allocation2 + $0x50] sm:$0xff]
    %v223 = vld [vmem:[#allocation2 + $0x58] sm:$0xff]
    %v224 = vld [vmem:[#allocation2 + $0x60] sm:$0xff]
    %v225 = vld [vmem:[#allocation2 + $0x68] sm:$0xff]
    %v226 = vld [vmem:[#allocation2 + $0x70] sm:$0xff]
    %v227 = vld [vmem:[#allocation2 + $0x78] sm:$0xff]
    %v228 = vld [vmem:[#allocation2 + $0x80] sm:$0xff]
    %v229 = vld [vmem:[#allocation2 + $0x88] sm:$0xff]
    %v230 = vld [vmem:[#allocation2 + $0x90] sm:$0xff]
    %v231 = vld [vmem:[#allocation2 + $0x98] sm:$0xff]
    %v232 = vld [vmem:[#allocation2 + $0xa0] sm:$0xff]
    %v233 = vld [vmem:[#allocation2 + $0xa8] sm:$0xff]
    %v234 = vld [vmem:[#allocation2 + $0xb0] sm:$0xff]
    %v235 = vld [vmem:[#allocation2 + $0xb8] sm:$0xff]
    %v236 = vld [vmem:[#allocation2 + $0xc0] sm:$0xff]
    %v237 = vld [vmem:[#allocation2 + $0xc8] sm:$0xff]
    %v238 = vld [vmem:[#allocation2 + $0xd0] sm:$0xff]
    %v239 = vld [vmem:[#allocation2 + $0xd8] sm:$0xff]
    %v240 = vld [vmem:[#allocation2 + $0xe0] sm:$0xff]
    %v241 = vld [vmem:[#allocation2 + $0xe8] sm:$0xff]
    %v242 = vld [vmem:[#allocation2 + $0xf0] sm:$0xff]
    %v243 = vld [vmem:[#allocation2 + $0xf8] sm:$0xff]
    %v244 = vld [vmem:[#allocation2 + $0x100] sm:$0xff]
    %v245 = vld [vmem:[#allocation2 + $0x108] sm:$0xff]
    %v246 = vld [vmem:[#allocation2 + $0x110] sm:$0xff]
    %v247 = vld [vmem:[#allocation2 + $0x118] sm:$0xff]
    %v248 = vld [vmem:[#allocation2 + $0x120] sm:$0xff]
    %v249 = vld [vmem:[#allocation2 + $0x128] sm:$0xff]
    %v250 = vld [vmem:[#allocation2 + $0x130] sm:$0xff]
    %v251 = vld [vmem:[#allocation2 + $0x138] sm:$0xff]
    %v252 = vld [vmem:[#allocation2 + $0x140] sm:$0xff]
    %v253 = vld [vmem:[#allocation2 + $0x148] sm:$0xff]
    %v254 = vld [vmem:[#allocation2 + $0x150] sm:$0xff]
    %v255 = vld [vmem:[#allocation2 + $0x158] sm:$0xff]
    %v256 = vld [vmem:[#allocation2 + $0x160] sm:$0xff]
    %v257 = vld [vmem:[#allocation2 + $0x168] sm:$0xff]
    %v258 = vld [vmem:[#allocation2 + $0x170] sm:$0xff]
    %v259 = vld [vmem:[#allocation2 + $0x178] sm:$0xff]
    %v260 = vld [vmem:[#allocation2 + $0x180] sm:$0xff]
    %v261 = vld [vmem:[#allocation2 + $0x188] sm:$0xff]
    %v262 = vld [vmem:[#allocation2 + $0x190] sm:$0xff]
    %v263 = vld [vmem:[#allocation2 + $0x198] sm:$0xff]
    %v264 = vld [vmem:[#allocation2 + $0x1a0] sm:$0xff]
    %v265 = vld [vmem:[#allocation2 + $0x1a8] sm:$0xff]
    %v266 = vld [vmem:[#allocation2 + $0x1b0] sm:$0xff]
    %v267 = vld [vmem:[#allocation2 + $0x1b8] sm:$0xff]
    %v268 = vld [vmem:[#allocation2 + $0x1c0] sm:$0xff]
    %v269 = vld [vmem:[#allocation2 + $0x1c8] sm:$0xff]
    %v270 = vld [vmem:[#allocation2 + $0x1d0] sm:$0xff]
    %v271 = vld [vmem:[#allocation2 + $0x1d8] sm:$0xff]
    %v272 = vld [vmem:[#allocation2 + $0x1e0] sm:$0xff]
    %v273 = vld [vmem:[#allocation2 + $0x1e8] sm:$0xff]
    %v274 = vld [vmem:[#allocation2 + $0x1f0] sm:$0xff]
    %v275 = vld [vmem:[#allocation2 + $0x1f8] sm:$0xff]
    %v276 = vld [vmem:[%s1 + $0x20] sm:$0xff]
    %v277 = vld [vmem:[%s1 + $0x28] sm:$0xff]
    %v278 = vld [vmem:[%s1 + $0x30] sm:$0xff]
    %v279 = vld [vmem:[%s1 + $0x38] sm:$0xff]
    %v280 = vld [vmem:[%s1 + $0x60] sm:$0xff]
    %v281 = vld [vmem:[%s1 + $0x68] sm:$0xff]
    %v282 = vld [vmem:[%s1 + $0x70] sm:$0xff]
    %v283 = vld [vmem:[%s1 + $0x78] sm:$0xff]
    %v284 = vld [vmem:[%s1 + $0xa0] sm:$0xff]
    %v285 = vld [vmem:[%s1 + $0xa8] sm:$0xff]
    %v286 = vld [vmem:[%s1 + $0xb0] sm:$0xff]
    %v287 = vld [vmem:[%s1 + $0xb8] sm:$0xff]
    %v288 = vld [vmem:[%s1 + $0xe0] sm:$0xff]
    %v289 = vld [vmem:[%s1 + $0xe8] sm:$0xff]
    %v290 = vld [vmem:[%s1 + $0xf0] sm:$0xff]
    %v291 = vld [vmem:[%s1 + $0xf8] sm:$0xff]
    %v292 = vld [vmem:[%s1 + $0x120] sm:$0xff]
    %v293 = vld [vmem:[%s1 + $0x128] sm:$0xff]
    %v294 = vld [vmem:[%s1 + $0x130] sm:$0xff]
    %v295 = vld [vmem:[%s1 + $0x138] sm:$0xff]
    %v296 = vld [vmem:[%s1 + $0x160] sm:$0xff]
    %v297 = vld [vmem:[%s1 + $0x168] sm:$0xff]
    %v298 = vld [vmem:[%s1 + $0x170] sm:$0xff]
    %v299 = vld [vmem:[%s1 + $0x178] sm:$0xff]
    %v300 = vld [vmem:[%s1 + $0x1a0] sm:$0xff]
    %v301 = vld [vmem:[%s1 + $0x1a8] sm:$0xff]
    %v302 = vld [vmem:[%s1 + $0x1b0] sm:$0xff]
    %v303 = vld [vmem:[%s1 + $0x1b8] sm:$0xff]
    %v304 = vld [vmem:[%s1 + $0x1e0] sm:$0xff]
    %v305 = vld [vmem:[%s1 + $0x1e8] sm:$0xff]
    %v306 = vld [vmem:[%s1 + $0x1f0] sm:$0xff]
    %v307 = vld [vmem:[%s1 + $0x1f8] sm:$0xff]
    %v308 = vld [vmem:[%s1 + $0x220] sm:$0xff]
    %v309 = vld [vmem:[%s1 + $0x228] sm:$0xff]
    %v310 = vld [vmem:[%s1 + $0x230] sm:$0xff]
    %v311 = vld [vmem:[%s1 + $0x238] sm:$0xff]
    %v312 = vld [vmem:[%s1 + $0x260] sm:$0xff]
    %v313 = vld [vmem:[%s1 + $0x268] sm:$0xff]
    %v314 = vld [vmem:[%s1 + $0x270] sm:$0xff]
    %v315 = vld [vmem:[%s1 + $0x278] sm:$0xff]
    %v316 = vld [vmem:[%s1 + $0x2a0] sm:$0xff]
    %v317 = vld [vmem:[%s1 + $0x2a8] sm:$0xff]
    %v318 = vld [vmem:[%s1 + $0x2b0] sm:$0xff]
    %v319 = vld [vmem:[%s1 + $0x2b8] sm:$0xff]
    %v320 = vld [vmem:[%s1 + $0x2e0] sm:$0xff]
    %v321 = vld [vmem:[%s1 + $0x2e8] sm:$0xff]
    %v322 = vld [vmem:[%s1 + $0x2f0] sm:$0xff]
    %v323 = vld [vmem:[%s1 + $0x2f8] sm:$0xff]
    %v324 = vld [vmem:[%s1 + $0x320] sm:$0xff]
    %v325 = vld [vmem:[%s1 + $0x328] sm:$0xff]
    %v326 = vld [vmem:[%s1 + $0x330] sm:$0xff]
    %v327 = vld [vmem:[%s1 + $0x338] sm:$0xff]
    %v328 = vld [vmem:[%s1 + $0x360] sm:$0xff]
    %v329 = vld [vmem:[%s1 + $0x368] sm:$0xff]
    %v330 = vld [vmem:[%s1 + $0x370] sm:$0xff]
    %v331 = vld [vmem:[%s1 + $0x378] sm:$0xff]
    %v332 = vld [vmem:[%s1 + $0x3a0] sm:$0xff]
    %v333 = vld [vmem:[%s1 + $0x3a8] sm:$0xff]
    %v334 = vld [vmem:[%s1 + $0x3b0] sm:$0xff]
    %v335 = vld [vmem:[%s1 + $0x3b8] sm:$0xff]
    %v336 = vld [vmem:[%s1 + $0x3e0] sm:$0xff]
    %v337 = vld [vmem:[%s1 + $0x3e8] sm:$0xff]
    %v338 = vld [vmem:[%s1 + $0x3f0] sm:$0xff]
    %v339 = vld [vmem:[%s1 + $0x3f8] sm:$0xff]
    %v340 = vld [vmem:[%s2 + $0x4] sm:$0xf]
    %v342 = vperm.slane %v340, 0
    %v343 = vperm.slane %v340, 1
    %v344 = vperm.slane %v340, 2
    %v345 = vperm.slane %v340, 3
    %350 = vmatpush.msra.mxu0 %v336
    %351 = vmatpush.msra.mxu0 %v332
    %352 = vmatpush.msra.mxu0 %v328
    %353 = vmatpush.msra.mxu0 %v324
    %354 = vmatpush.msra.mxu0 %v320
    %355 = vmatpush.msra.mxu0 %v316
    %356 = vmatpush.msra.mxu0 %v312
    %357 = vmatpush.msra.mxu0 %v308
    %358 = vmatpush.msra.mxu0 %v304
    %359 = vmatpush.msra.mxu0 %v300
    %360 = vmatpush.msra.mxu0 %v296
    %361 = vmatpush.msra.mxu0 %v292
    %362 = vmatpush.msra.mxu0 %v288
    %363 = vmatpush.msra.mxu0 %v284
    %364 = vmatpush.msra.mxu0 %v280
    %365 = vmatpush.msra.mxu0 %v276
    %366 = vmatmul.f32.gmra.mxu0 %v36
    %v367 = vpop.f32.mrf.mxu0
    %v368 = vadd.f32 %v342, %v367
    %369 = vmatmul.f32.gmra.mxu0 %v37
    %v370 = vpop.f32.mrf.mxu0
    %v371 = vadd.f32 %v342, %v370
    %372 = vdwg.mxu0
    %373 = vmatpush.msra.mxu0 %v337
    %374 = vmatpush.msra.mxu0 %v333
    %375 = vmatpush.msra.mxu0 %v329
    %376 = vmatpush.msra.mxu0 %v325
    %377 = vmatpush.msra.mxu0 %v321
    %378 = vmatpush.msra.mxu0 %v317
    %379 = vmatpush.msra.mxu0 %v313
    %380 = vmatpush.msra.mxu0 %v309
    %381 = vmatpush.msra.mxu0 %v305
    %382 = vmatpush.msra.mxu0 %v301
    %383 = vmatpush.msra.mxu0 %v297
    %384 = vmatpush.msra.mxu0 %v293
    %385 = vmatpush.msra.mxu0 %v289
    %386 = vmatpush.msra.mxu0 %v285
    %387 = vmatpush.msra.mxu0 %v281
    %388 = vmatpush.msra.mxu0 %v277
    %389 = vmatmul.f32.gmra.mxu0 %v36
    %v390 = vpop.f32.mrf.mxu0
    %v391 = vadd.f32 %v343, %v390
    %392 = vmatmul.f32.gmra.mxu0 %v37
    %v393 = vpop.f32.mrf.mxu0
    %v394 = vadd.f32 %v343, %v393
    %395 = vdwg.mxu0
    %396 = vmatpush.msra.mxu0 %v338
    %397 = vmatpush.msra.mxu0 %v334
    %398 = vmatpush.msra.mxu0 %v330
    %399 = vmatpush.msra.mxu0 %v326
    %400 = vmatpush.msra.mxu0 %v322
    %401 = vmatpush.msra.mxu0 %v318
    %402 = vmatpush.msra.mxu0 %v314
    %403 = vmatpush.msra.mxu0 %v310
    %404 = vmatpush.msra.mxu0 %v306
    %405 = vmatpush.msra.mxu0 %v302
    %406 = vmatpush.msra.mxu0 %v298
    %407 = vmatpush.msra.mxu0 %v294
    %408 = vmatpush.msra.mxu0 %v290
    %409 = vmatpush.msra.mxu0 %v286
    %410 = vmatpush.msra.mxu0 %v282
    %411 = vmatpush.msra.mxu0 %v278
    %412 = vmatmul.f32.gmra.mxu0 %v36
    %v413 = vpop.f32.mrf.mxu0
    %v414 = vadd.f32 %v344, %v413
    %415 = vmatmul.f32.gmra.mxu0 %v37
    %v416 = vpop.f32.mrf.mxu0
    %v417 = vadd.f32 %v344, %v416
    %418 = vdwg.mxu0
    %419 = vmatpush.msra.mxu0 %v339
    %420 = vmatpush.msra.mxu0 %v335
    %421 = vmatpush.msra.mxu0 %v331
    %422 = vmatpush.msra.mxu0 %v327
    %423 = vmatpush.msra.mxu0 %v323
    %424 = vmatpush.msra.mxu0 %v319
    %425 = vmatpush.msra.mxu0 %v315
    %426 = vmatpush.msra.mxu0 %v311
    %427 = vmatpush.msra.mxu0 %v307
    %428 = vmatpush.msra.mxu0 %v303
    %429 = vmatpush.msra.mxu0 %v299
    %430 = vmatpush.msra.mxu0 %v295
    %431 = vmatpush.msra.mxu0 %v291
    %432 = vmatpush.msra.mxu0 %v287
    %433 = vmatpush.msra.mxu0 %v283
    %434 = vmatpush.msra.mxu0 %v279
    %435 = vmatmul.f32.gmra.mxu0 %v36
    %v436 = vpop.f32.mrf.mxu0
    %v437 = vadd.f32 %v345, %v436
    %438 = vmatmul.f32.gmra.mxu0 %v37
    %v439 = vpop.f32.mrf.mxu0
    %v440 = vadd.f32 %v345, %v439
    %441 = vdwg.mxu0
    %v442 = vmax.f32 %v368, 0.0
    %v443 = vmax.f32 %v391, 0.0
    %v444 = vmax.f32 %v414, 0.0
    %v445 = vmax.f32 %v437, 0.0
    %v446 = vmax.f32 %v371, 0.0
    %v447 = vmax.f32 %v394, 0.0
    %v448 = vmax.f32 %v417, 0.0
    %v449 = vmax.f32 %v440, 0.0
    %v450 = vld [vmem:[#allocation2 + $0x200] sm:$0xff]
    %v451 = vld [vmem:[#allocation2 + $0x208] sm:$0xff]
    %v452 = vld [vmem:[#allocation2 + $0x210] sm:$0xff]
    %v453 = vld [vmem:[#allocation2 + $0x218] sm:$0xff]
    %v454 = vld [vmem:[#allocation2 + $0x220] sm:$0xff]
    %v455 = vld [vmem:[#allocation2 + $0x228] sm:$0xff]
    %v456 = vld [vmem:[#allocation2 + $0x230] sm:$0xff]
    %v457 = vld [vmem:[#allocation2 + $0x238] sm:$0xff]
    %v458 = vld [vmem:[#allocation2 + $0x240] sm:$0xff]
    %v459 = vld [vmem:[#allocation2 + $0x248] sm:$0xff]
    %v460 = vld [vmem:[#allocation2 + $0x250] sm:$0xff]
    %v461 = vld [vmem:[#allocation2 + $0x258] sm:$0xff]
    %v462 = vld [vmem:[#allocation2 + $0x260] sm:$0xff]
    %v463 = vld [vmem:[#allocation2 + $0x268] sm:$0xff]
    %v464 = vld [vmem:[#allocation2 + $0x270] sm:$0xff]
    %v465 = vld [vmem:[#allocation2 + $0x278] sm:$0xff]
    %v466 = vld [vmem:[#allocation2 + $0x280] sm:$0xff]
    %v467 = vld [vmem:[#allocation2 + $0x288] sm:$0xff]
    %v468 = vld [vmem:[#allocation2 + $0x290] sm:$0xff]
    %v469 = vld [vmem:[#allocation2 + $0x298] sm:$0xff]
    %v470 = vld [vmem:[#allocation2 + $0x2a0] sm:$0xff]
    %v471 = vld [vmem:[#allocation2 + $0x2a8] sm:$0xff]
    %v472 = vld [vmem:[#allocation2 + $0x2b0] sm:$0xff]
    %v473 = vld [vmem:[#allocation2 + $0x2b8] sm:$0xff]
    %v474 = vld [vmem:[#allocation2 + $0x2c0] sm:$0xff]
    %v475 = vld [vmem:[#allocation2 + $0x2c8] sm:$0xff]
    %v476 = vld [vmem:[#allocation2 + $0x2d0] sm:$0xff]
    %v477 = vld [vmem:[#allocation2 + $0x2d8] sm:$0xff]
    %v478 = vld [vmem:[#allocation2 + $0x2e0] sm:$0xff]
    %v479 = vld [vmem:[#allocation2 + $0x2e8] sm:$0xff]
    %v480 = vld [vmem:[#allocation2 + $0x2f0] sm:$0xff]
    %v481 = vld [vmem:[#allocation2 + $0x2f8] sm:$0xff]
    %v482 = vld [vmem:[#allocation2 + $0x300] sm:$0xff]
    %v483 = vld [vmem:[#allocation2 + $0x308] sm:$0xff]
    %v484 = vld [vmem:[#allocation2 + $0x310] sm:$0xff]
    %v485 = vld [vmem:[#allocation2 + $0x318] sm:$0xff]
    %v486 = vld [vmem:[#allocation2 + $0x320] sm:$0xff]
    %v487 = vld [vmem:[#allocation2 + $0x328] sm:$0xff]
    %v488 = vld [vmem:[#allocation2 + $0x330] sm:$0xff]
    %v489 = vld [vmem:[#allocation2 + $0x338] sm:$0xff]
    %v490 = vld [vmem:[#allocation2 + $0x340] sm:$0xff]
    %v491 = vld [vmem:[#allocation2 + $0x348] sm:$0xff]
    %v492 = vld [vmem:[#allocation2 + $0x350] sm:$0xff]
    %v493 = vld [vmem:[#allocation2 + $0x358] sm:$0xff]
    %v494 = vld [vmem:[#allocation2 + $0x360] sm:$0xff]
    %v495 = vld [vmem:[#allocation2 + $0x368] sm:$0xff]
    %v496 = vld [vmem:[#allocation2 + $0x370] sm:$0xff]
    %v497 = vld [vmem:[#allocation2 + $0x378] sm:$0xff]
    %v498 = vld [vmem:[#allocation2 + $0x380] sm:$0xff]
    %v499 = vld [vmem:[#allocation2 + $0x388] sm:$0xff]
    %v500 = vld [vmem:[#allocation2 + $0x390] sm:$0xff]
    %v501 = vld [vmem:[#allocation2 + $0x398] sm:$0xff]
    %v502 = vld [vmem:[#allocation2 + $0x3a0] sm:$0xff]
    %v503 = vld [vmem:[#allocation2 + $0x3a8] sm:$0xff]
    %v504 = vld [vmem:[#allocation2 + $0x3b0] sm:$0xff]
    %v505 = vld [vmem:[#allocation2 + $0x3b8] sm:$0xff]
    %v506 = vld [vmem:[#allocation2 + $0x3c0] sm:$0xff]
    %v507 = vld [vmem:[#allocation2 + $0x3c8] sm:$0xff]
    %v508 = vld [vmem:[#allocation2 + $0x3d0] sm:$0xff]
    %v509 = vld [vmem:[#allocation2 + $0x3d8] sm:$0xff]
    %v510 = vld [vmem:[#allocation2 + $0x3e0] sm:$0xff]
    %v511 = vld [vmem:[#allocation2 + $0x3e8] sm:$0xff]
    %v512 = vld [vmem:[#allocation2 + $0x3f0] sm:$0xff]
    %v513 = vld [vmem:[#allocation2 + $0x3f8] sm:$0xff]
    %514 = vmatpush.msra.mxu0 %v465
    %515 = vmatpush.msra.mxu0 %v464
    %516 = vmatpush.msra.mxu0 %v463
    %517 = vmatpush.msra.mxu0 %v462
    %518 = vmatpush.msra.mxu0 %v461
    %519 = vmatpush.msra.mxu0 %v460
    %520 = vmatpush.msra.mxu0 %v459
    %521 = vmatpush.msra.mxu0 %v458
    %522 = vmatpush.msra.mxu0 %v457
    %523 = vmatpush.msra.mxu0 %v456
    %524 = vmatpush.msra.mxu0 %v455
    %525 = vmatpush.msra.mxu0 %v454
    %526 = vmatpush.msra.mxu0 %v453
    %527 = vmatpush.msra.mxu0 %v452
    %528 = vmatpush.msra.mxu0 %v451
    %529 = vmatpush.msra.mxu0 %v450
    %530 = vmatmul.f32.gmra.mxu0 %v442
    %v531 = vpop.f32.mrf.mxu0
    %v532 = vadd.f32 0.0, %v531
    %533 = vmatmul.f32.gmra.mxu0 %v446
    %v534 = vpop.f32.mrf.mxu0
    %v535 = vadd.f32 0.0, %v534
    %536 = vdwg.mxu0
    %537 = vmatpush.msra.mxu0 %v481
    %538 = vmatpush.msra.mxu0 %v480
    %539 = vmatpush.msra.mxu0 %v479
    %540 = vmatpush.msra.mxu0 %v478
    %541 = vmatpush.msra.mxu0 %v477
    %542 = vmatpush.msra.mxu0 %v476
    %543 = vmatpush.msra.mxu0 %v475
    %544 = vmatpush.msra.mxu0 %v474
    %545 = vmatpush.msra.mxu0 %v473
    %546 = vmatpush.msra.mxu0 %v472
    %547 = vmatpush.msra.mxu0 %v471
    %548 = vmatpush.msra.mxu0 %v470
    %549 = vmatpush.msra.mxu0 %v469
    %550 = vmatpush.msra.mxu0 %v468
    %551 = vmatpush.msra.mxu0 %v467
    %552 = vmatpush.msra.mxu0 %v466
    %553 = vmatmul.f32.gmra.mxu0 %v443
    %v554 = vpop.f32.mrf.mxu0
    %v555 = vadd.f32 %v532, %v554
    %556 = vmatmul.f32.gmra.mxu0 %v447
    %v557 = vpop.f32.mrf.mxu0
    %v558 = vadd.f32 %v535, %v557
    %559 = vdwg.mxu0
    %560 = vmatpush.msra.mxu0 %v497
    %561 = vmatpush.msra.mxu0 %v496
    %562 = vmatpush.msra.mxu0 %v495
    %563 = vmatpush.msra.mxu0 %v494
    %564 = vmatpush.msra.mxu0 %v493
    %565 = vmatpush.msra.mxu0 %v492
    %566 = vmatpush.msra.mxu0 %v491
    %567 = vmatpush.msra.mxu0 %v490
    %568 = vmatpush.msra.mxu0 %v489
    %569 = vmatpush.msra.mxu0 %v488
    %570 = vmatpush.msra.mxu0 %v487
    %571 = vmatpush.msra.mxu0 %v486
    %572 = vmatpush.msra.mxu0 %v485
    %573 = vmatpush.msra.mxu0 %v484
    %574 = vmatpush.msra.mxu0 %v483
    %575 = vmatpush.msra.mxu0 %v482
    %576 = vmatmul.f32.gmra.mxu0 %v444
    %v577 = vpop.f32.mrf.mxu0
    %v578 = vadd.f32 %v555, %v577
    %579 = vmatmul.f32.gmra.mxu0 %v448
    %v580 = vpop.f32.mrf.mxu0
    %v581 = vadd.f32 %v558, %v580
    %582 = vdwg.mxu0
    %583 = vmatpush.msra.mxu0 %v513
    %584 = vmatpush.msra.mxu0 %v512
    %585 = vmatpush.msra.mxu0 %v511
    %586 = vmatpush.msra.mxu0 %v510
    %587 = vmatpush.msra.mxu0 %v509
    %588 = vmatpush.msra.mxu0 %v508
    %589 = vmatpush.msra.mxu0 %v507
    %590 = vmatpush.msra.mxu0 %v506
    %591 = vmatpush.msra.mxu0 %v505
    %592 = vmatpush.msra.mxu0 %v504
    %593 = vmatpush.msra.mxu0 %v503
    %594 = vmatpush.msra.mxu0 %v502
    %595 = vmatpush.msra.mxu0 %v501
    %596 = vmatpush.msra.mxu0 %v500
    %597 = vmatpush.msra.mxu0 %v499
    %598 = vmatpush.msra.mxu0 %v498
    %599 = vmatmul.f32.gmra.mxu0 %v445
    %v600 = vpop.f32.mrf.mxu0
    %v601 = vadd.f32 %v578, %v600
    %602 = vmatmul.f32.gmra.mxu0 %v449
    %v603 = vpop.f32.mrf.mxu0
    %v604 = vadd.f32 %v581, %v603
    %605 = vdwg.mxu0
    %606 = vmatpush.msra.mxu0 %v227
    %607 = vmatpush.msra.mxu0 %v226
    %608 = vmatpush.msra.mxu0 %v225
    %609 = vmatpush.msra.mxu0 %v224
    %610 = vmatpush.msra.mxu0 %v223
    %611 = vmatpush.msra.mxu0 %v222
    %612 = vmatpush.msra.mxu0 %v221
    %613 = vmatpush.msra.mxu0 %v220
    %614 = vmatpush.msra.mxu0 %v219
    %615 = vmatpush.msra.mxu0 %v218
    %616 = vmatpush.msra.mxu0 %v217
    %617 = vmatpush.msra.mxu0 %v216
    %618 = vmatpush.msra.mxu0 %v215
    %619 = vmatpush.msra.mxu0 %v214
    %620 = vmatpush.msra.mxu0 %v213
    %621 = vmatpush.msra.mxu0 %v212
    %622 = vmatmul.f32.gmra.mxu0 %v204
    %v623 = vpop.f32.mrf.mxu0
    %v624 = vadd.f32 %v601, %v623
    %625 = vmatmul.f32.gmra.mxu0 %v208
    %v626 = vpop.f32.mrf.mxu0
    %v627 = vadd.f32 %v604, %v626
    %628 = vdwg.mxu0
    %629 = vmatpush.msra.mxu0 %v243
    %630 = vmatpush.msra.mxu0 %v242
    %631 = vmatpush.msra.mxu0 %v241
    %632 = vmatpush.msra.mxu0 %v240
    %633 = vmatpush.msra.mxu0 %v239
    %634 = vmatpush.msra.mxu0 %v238
    %635 = vmatpush.msra.mxu0 %v237
    %636 = vmatpush.msra.mxu0 %v236
    %637 = vmatpush.msra.mxu0 %v235
    %638 = vmatpush.msra.mxu0 %v234
    %639 = vmatpush.msra.mxu0 %v233
    %640 = vmatpush.msra.mxu0 %v232
    %641 = vmatpush.msra.mxu0 %v231
    %642 = vmatpush.msra.mxu0 %v230
    %643 = vmatpush.msra.mxu0 %v229
    %644 = vmatpush.msra.mxu0 %v228
    %645 = vmatmul.f32.gmra.mxu0 %v205
    %v646 = vpop.f32.mrf.mxu0
    %v647 = vadd.f32 %v624, %v646
    %648 = vmatmul.f32.gmra.mxu0 %v209
    %v649 = vpop.f32.mrf.mxu0
    %v650 = vadd.f32 %v627, %v649
    %651 = vdwg.mxu0
    %652 = vmatpush.msra.mxu0 %v259
    %653 = vmatpush.msra.mxu0 %v258
    %654 = vmatpush.msra.mxu0 %v257
    %655 = vmatpush.msra.mxu0 %v256
    %656 = vmatpush.msra.mxu0 %v255
    %657 = vmatpush.msra.mxu0 %v254
    %658 = vmatpush.msra.mxu0 %v253
    %659 = vmatpush.msra.mxu0 %v252
    %660 = vmatpush.msra.mxu0 %v251
    %661 = vmatpush.msra.mxu0 %v250
    %662 = vmatpush.msra.mxu0 %v249
    %663 = vmatpush.msra.mxu0 %v248
    %664 = vmatpush.msra.mxu0 %v247
    %665 = vmatpush.msra.mxu0 %v246
    %666 = vmatpush.msra.mxu0 %v245
    %667 = vmatpush.msra.mxu0 %v244
    %668 = vmatmul.f32.gmra.mxu0 %v206
    %v669 = vpop.f32.mrf.mxu0
    %v670 = vadd.f32 %v647, %v669
    %671 = vmatmul.f32.gmra.mxu0 %v210
    %v672 = vpop.f32.mrf.mxu0
    %v673 = vadd.f32 %v650, %v672
    %674 = vdwg.mxu0
    %675 = vmatpush.msra.mxu0 %v275
    %676 = vmatpush.msra.mxu0 %v274
    %677 = vmatpush.msra.mxu0 %v273
    %678 = vmatpush.msra.mxu0 %v272
    %679 = vmatpush.msra.mxu0 %v271
    %680 = vmatpush.msra.mxu0 %v270
    %681 = vmatpush.msra.mxu0 %v269
    %682 = vmatpush.msra.mxu0 %v268
    %683 = vmatpush.msra.mxu0 %v267
    %684 = vmatpush.msra.mxu0 %v266
    %685 = vmatpush.msra.mxu0 %v265
    %686 = vmatpush.msra.mxu0 %v264
    %687 = vmatpush.msra.mxu0 %v263
    %688 = vmatpush.msra.mxu0 %v262
    %689 = vmatpush.msra.mxu0 %v261
    %690 = vmatpush.msra.mxu0 %v260
    %691 = vmatmul.f32.gmra.mxu0 %v207
    %v692 = vpop.f32.mrf.mxu0
    %v693 = vadd.f32 %v670, %v692
    %694 = vmatmul.f32.gmra.mxu0 %v211
    %v695 = vpop.f32.mrf.mxu0
    %v696 = vadd.f32 %v673, %v695
    %697 = vdwg.mxu0
    %v698 = vld [vmem:[%s4] sm:$0x1]
    %v700 = vperm.slane %v698, 0
    %v702 = vadd.f32 %v693, %v700
    %v703 = vadd.f32 %v696, %v700
    %704 = vst [vmem:[%s5] sm:$0xff] %v702
    %705 = vst [vmem:[%s5 + $0x8] sm:$0xff] %v703
    // Predicated region
    $region26: #{_mlp_forward_impl.1} parent=1 // pred_check
      _
    $region27: #{_mlp_forward_impl.1} parent=1 // pred_check_branch
      %707 = sbr.rel (0) target = $region29
    $region28: #{_mlp_forward_impl.1} parent=1 // pred_region
      _
    $region29: #{_mlp_forward_impl.1} parent=1 // pred_fallthru
      _
    // Predicated region
    $region30: #{_mlp_forward_impl.1} parent=1 // pred_check
      _
    $region31: #{_mlp_forward_impl.1} parent=1 // pred_check_branch
      %709 = sbr.rel (0) target = $region33
    $region32: #{_mlp_forward_impl.1} parent=1 // pred_region
      _
    $region33: #{_mlp_forward_impl.1} parent=1 // pred_fallthru
      _
    %710 = vsyncpa [#allocation3], 1

</llo_original>
